<compile_context>
chip_gen: v6e
topology: v6e:2x2x1
jax: 0.10.0
libtpu: 0.0.40
codegen_flags: <defaults>
</compile_context>

<pallas_src>
import functools

import jax
import jax.numpy as jnp
import numpy as np
from jax.experimental import pallas as pl
from jax.experimental.pallas import tpu as pltpu

_NEG_BIG = -1.0e30  # effectively -inf for padded vocab entries, but exp-safe


def _log_sigmoid(x):
    # numerically stable log(sigmoid(x)) = -softplus(-x)
    return -(jnp.maximum(-x, 0.0) + jnp.log1p(jnp.exp(-jnp.abs(x))))


def _simpo_pair_kernel(xc_ref, xr_ref, tc_ref, tr_ref, w_ref, b_ref, out_ref,
                       m_scr, l_scr, g_scr,
                       *, ignore_index, beta, gamma, label_smoothing,
                       vocab_chunk, seq_len):
    T = seq_len
    v = pl.program_id(1)
    nv = pl.num_programs(1)

    @pl.when(v == 0)
    def _init():
        m_scr[...] = jnp.full_like(m_scr, -jnp.inf)
        l_scr[...] = jnp.zeros_like(l_scr)
        g_scr[...] = jnp.zeros_like(g_scr)

    # Fuse chosen + rejected into one (2T, H) operand -> a single MXU call per chunk.
    x2 = jnp.concatenate([xc_ref[0], xr_ref[0]], axis=0)          # (2T, H) native dtype
    tgt = jnp.concatenate([tc_ref[0], tr_ref[0]], axis=0)         # (2T, 1) int32
    mask = tgt != ignore_index                                    # (2T, 1)
    label = jnp.where(mask, tgt, 0)                               # (2T, 1)

    # logits chunk (2T, Vc) = x2 @ w_chunk.T + bias_chunk   (no transpose materialized)
    logits = jax.lax.dot_general(
        x2, w_ref[...],
        dimension_numbers=(((1,), (1,)), ((), ())),
        preferred_element_type=jnp.float32) + b_ref[...]          # (2T, Vc) f32

    # ---- online logsumexp update (flash-style) ----
    m_prev = m_scr[...]                                           # (2T, 1)
    m_new = jnp.maximum(m_prev, jnp.max(logits, axis=1, keepdims=True))
    corr = jnp.exp(m_prev - m_new)
    l_scr[...] = l_scr[...] * corr + jnp.sum(jnp.exp(logits - m_new),
                                             axis=1, keepdims=True)
    m_scr[...] = m_new

    # ---- chunk-aware one-hot gather of the target logit ----
    col = jax.lax.broadcasted_iota(jnp.int32, logits.shape, 1) + v * vocab_chunk
    onehot = col == label
    g_scr[...] = g_scr[...] + jnp.sum(jnp.where(onehot, logits, 0.0),
                                      axis=1, keepdims=True)

    @pl.when(v == nv - 1)
    def _finalize():
        lse = m_scr[...] + jnp.log(l_scr[...])                    # (2T, 1)
        per_tok = g_scr[...] - lse                                # target log-probs
        maskf = mask.astype(jnp.float32)
        masked = per_tok * maskf
        sum_c = jnp.sum(masked[0:T, :])
        sum_r = jnp.sum(masked[T:2 * T, :])
        cnt_c = jnp.sum(maskf[0:T, :])
        cnt_r = jnp.sum(maskf[T:2 * T, :])
        avg_c = sum_c / jnp.maximum(cnt_c, 1.0)                   # guarded divide
        avg_r = sum_r / jnp.maximum(cnt_r, 1.0)

        z = beta * (avg_c - avg_r) - gamma
        pref = (-_log_sigmoid(z) * (1.0 - label_smoothing)
                - _log_sigmoid(-z) * label_smoothing)

        # Pack per-pair scalars into a lane-dense (8, 128) slab:
        # lane 0: SimPO term, lane 1: chosen NLL sum, lane 2: chosen token count,
        # lane 3: chosen reward (beta*avg_c), lane 4: rejected reward (beta*avg_r).
        lane = jax.lax.broadcasted_iota(jnp.int32, (8, 128), 1)
        row = (pref * (lane == 0).astype(jnp.float32)
               + (-sum_c) * (lane == 1).astype(jnp.float32)
               + cnt_c * (lane == 2).astype(jnp.float32)
               + (beta * avg_c) * (lane == 3).astype(jnp.float32)
               + (beta * avg_r) * (lane == 4).astype(jnp.float32))
        out_ref[...] = row[None, :, :]


def _round_up(x, m):
    return ((x + m - 1) // m) * m


def fused_linear_simpo_loss(_input, weight, target, bias=None, *,
                            ignore_index=-100, beta=0.1, alpha=1.0,
                            label_smoothing=0.0, compute_nll_loss=True,
                            gamma=0.5, vocab_chunk=1024):
    B, T, H = _input.shape
    V, Hw = weight.shape
    assert H == Hw
    assert B % 2 == 0, "batch must stack chosen (first half) and rejected (second half)"
    NP = B // 2

    # Vocab tiling: chunk is a multiple of 128 lanes; pad V up to whole chunks.
    Vc = min(int(vocab_chunk), _round_up(V, 128))
    Vc = _round_up(Vc, 128)
    NV = pl.cdiv(V, Vc)
    V_pad = NV * Vc

    # Keep native dtypes (bf16 stays bf16 for the MXU).  Pad vocab if needed:
    # zero weight rows + very negative bias rows -> exp() underflows to 0, never gathered.
    w_p = jnp.pad(weight, ((0, V_pad - V), (0, 0)))
    if bias is None:
        b_full = jnp.zeros((V,), jnp.float32)
    else:
        b_full = bias.astype(jnp.float32)
    b_p = jnp.pad(b_full, (0, V_pad - V), constant_values=_NEG_BIG).reshape(1, V_pad)

    tgt3 = target.astype(jnp.int32).reshape(B, T, 1)

    kernel = functools.partial(
        _simpo_pair_kernel,
        ignore_index=ignore_index, beta=beta, gamma=gamma,
        label_smoothing=label_smoothing, vocab_chunk=Vc, seq_len=T)

    stats = pl.pallas_call(
        kernel,
        out_shape=jax.ShapeDtypeStruct((NP, 8, 128), jnp.float32),
        grid_spec=pltpu.PrefetchScalarGridSpec(
            num_scalar_prefetch=0,
            grid=(NP, NV),                                      # vocab reduction axis last
            in_specs=[
                pl.BlockSpec((1, T, H), lambda i, v: (i, 0, 0)),        # chosen acts
                pl.BlockSpec((1, T, H), lambda i, v: (i + NP, 0, 0)),   # rejected acts
                pl.BlockSpec((1, T, 1), lambda i, v: (i, 0, 0)),        # chosen targets
                pl.BlockSpec((1, T, 1), lambda i, v: (i + NP, 0, 0)),   # rejected targets
                pl.BlockSpec((Vc, H), lambda i, v: (v, 0)),             # streamed weight chunk
                pl.BlockSpec((1, Vc), lambda i, v: (0, v)),             # streamed bias chunk
            ],
            out_specs=pl.BlockSpec((1, 8, 128), lambda i, v: (i, 0, 0)),
            scratch_shapes=[
                pltpu.VMEM((2 * T, 1), jnp.float32),   # running max
                pltpu.VMEM((2 * T, 1), jnp.float32),   # running sum-exp
                pltpu.VMEM((2 * T, 1), jnp.float32),   # gathered target logit
            ]),
        compiler_params=pltpu.CompilerParams(
            dimension_semantics=("parallel", "arbitrary"),
            vmem_limit_bytes=56 * 1024 * 1024),
    )(_input, _input, tgt3, tgt3, w_p, b_p)

    pref_terms = stats[:, 0, 0]
    nll_sums = stats[:, 0, 1]
    cnt_chosen = stats[:, 0, 2]
    chosen_rewards = stats[:, 0, 3]
    rejected_rewards = stats[:, 0, 4]

    preference_loss = jnp.sum(pref_terms) / NP       # divide by full_target.shape[0] // 2
    loss = preference_loss
    if compute_nll_loss:
        nll = jnp.sum(nll_sums) / jnp.maximum(jnp.sum(cnt_chosen), 1.0)
        loss = alpha * nll + preference_loss
    return loss, (chosen_rewards, rejected_rewards)


class LigerFusedLinearSimPOLoss:
    """JAX/Pallas port of the PyTorch module's forward pass."""

    def __init__(self, ignore_index=-100, beta=0.1, alpha=1.0, label_smoothing=0.0,
                 compute_nll_loss=True, compiled=True, gamma=0.5, chunk_size=1,
                 vocab_chunk=1024):
        self.ignore_index = ignore_index
        self.beta = beta
        self.alpha = alpha
        self.label_smoothing = label_smoothing
        self.compute_nll_loss = compute_nll_loss
        self.compiled = compiled        # no-op in JAX port
        self.gamma = gamma
        self.chunk_size = chunk_size    # kernel processes one pair per outer grid step
        self.vocab_chunk = vocab_chunk  # streamed vocab tile (lanes), sized for VMEM

    def __call__(self, lin_weight, _input, target, bias=None):
        return fused_linear_simpo_loss(
            _input, lin_weight, target, bias,
            ignore_index=self.ignore_index, beta=self.beta, alpha=self.alpha,
            label_smoothing=self.label_smoothing,
            compute_nll_loss=self.compute_nll_loss, gamma=self.gamma,
            vocab_chunk=self.vocab_chunk)


def _reference(_input, weight, target, bias, *, ignore_index, beta, alpha,
               label_smoothing, compute_nll_loss, gamma):
    B = _input.shape[0]
    NP = B // 2
    logits = jnp.einsum("bth,vh->btv", _input, weight,
                        preferred_element_type=jnp.float32)
    if bias is not None:
        logits = logits + bias.astype(jnp.float32)
    logp = jax.nn.log_softmax(logits, axis=-1)
    mask = target != ignore_index
    label = jnp.where(mask, target, 0)
    per_tok = jnp.take_along_axis(logp, label[..., None], axis=-1)[..., 0]
    avg = jnp.sum(per_tok * mask, axis=-1) / jnp.sum(mask, axis=-1)
    c, r = avg[:NP], avg[NP:]
    z = beta * (c - r) - gamma
    pref = jnp.sum(-jax.nn.log_sigmoid(z) * (1 - label_smoothing)
                   - jax.nn.log_sigmoid(-z) * label_smoothing) / NP
    loss = pref
    if compute_nll_loss:
        nll = -jnp.sum(per_tok[:NP] * mask[:NP]) / jnp.sum(mask[:NP])
        loss = alpha * nll + pref
    return loss, (beta * c, beta * r)


if __name__ == "__main__":
    # B = 2 preference pairs (chosen rows 0..1, rejected rows 2..3);
    # V = 512 with vocab_chunk = 128 -> 4 streamed vocab chunks (exercises online LSE).
    B, T, H, V = 4, 8, 128, 512

    key = jax.random.PRNGKey(0)
    k_x, k_w, k_b, k_t = jax.random.split(key, 4)
    x_f32 = jax.random.normal(k_x, (B, T, H), dtype=jnp.float32)
    w_f32 = jax.random.normal(k_w, (V, H), dtype=jnp.float32) * 0.02
    bias = jax.random.normal(k_b, (V,), dtype=jnp.float32) * 0.01
    target = jax.random.randint(k_t, (B, T), 0, V, dtype=jnp.int32)
    # sprinkle some ignored positions to exercise the ignore_index masking
    target = target.at[0, 0].set(-100).at[3, 5].set(-100)

    loss_mod = LigerFusedLinearSimPOLoss(vocab_chunk=128)

    # ---- f32 activations / weights ----
    loss, (cr, rr) = loss_mod(w_f32, x_f32, target, bias)
    loss = jax.block_until_ready(loss)
    ref_loss, (ref_cr, ref_rr) = _reference(
        x_f32, w_f32, target, bias,
        ignore_index=-100, beta=0.1, alpha=1.0,
        label_smoothing=0.0, compute_nll_loss=True, gamma=0.5)
    np.testing.assert_allclose(np.asarray(loss), np.asarray(ref_loss), rtol=1e-4, atol=1e-4)
    np.testing.assert_allclose(np.asarray(cr), np.asarray(ref_cr), rtol=1e-4, atol=1e-4)
    np.testing.assert_allclose(np.asarray(rr), np.asarray(ref_rr), rtol=1e-4, atol=1e-4)

    # ---- bf16 activations / weights (native MXU dtype, f32 accumulation, no wrapper upcast) ----
    x_bf16 = x_f32.astype(jnp.bfloat16)
    w_bf16 = w_f32.astype(jnp.bfloat16)
    loss_bf, (cr_bf, rr_bf) = loss_mod(w_bf16, x_bf16, target, bias)
    loss_bf = jax.block_until_ready(loss_bf)
    ref_loss_bf, (ref_cr_bf, ref_rr_bf) = _reference(
        x_bf16, w_bf16, target, bias,
        ignore_index=-100, beta=0.1, alpha=1.0,
        label_smoothing=0.0, compute_nll_loss=True, gamma=0.5)
    np.testing.assert_allclose(np.asarray(loss_bf), np.asarray(ref_loss_bf), rtol=5e-3, atol=5e-3)
    np.testing.assert_allclose(np.asarray(cr_bf), np.asarray(ref_cr_bf), rtol=5e-3, atol=5e-3)
    np.testing.assert_allclose(np.asarray(rr_bf), np.asarray(ref_rr_bf), rtol=5e-3, atol=5e-3)

    # TODO(synk): backward pass / autograd chunking of the original Function is not implemented.
    print("KERNEL_OK")
</pallas_src>

<mosaic_0001>
module attributes {stable_mosaic.version = 11 : i64} {
  func.func @_simpo_pair_kernel(%arg0: i32, %arg1: i32, %arg2: memref<1x8x128xf32, #tpu.memory_space<vmem>>, %arg3: memref<1x8x128xf32, #tpu.memory_space<vmem>>, %arg4: memref<1x8x1xi32, #tpu.memory_space<vmem>>, %arg5: memref<1x8x1xi32, #tpu.memory_space<vmem>>, %arg6: memref<128x128xf32, #tpu.memory_space<vmem>>, %arg7: memref<1x128xf32, #tpu.memory_space<vmem>>, %arg8: memref<1x8x128xf32, #tpu.memory_space<vmem>>, %arg9: memref<16x1xf32, #tpu.memory_space<vmem>>, %arg10: memref<16x1xf32, #tpu.memory_space<vmem>>, %arg11: memref<16x1xf32, #tpu.memory_space<vmem>>) attributes {dimension_semantics = [#tpu.dimension_semantics<parallel>, #tpu.dimension_semantics<arbitrary>], iteration_bounds = array<i64: 2, 4>, scalar_prefetch = 0 : i64, scratch_operands = 3 : i64, tpu.core_type = #tpu.core_type<tc>, window_params = [{transform_indices = @transform_0, window_bounds = array<i64: 1, 8, 128>}, {transform_indices = @transform_1, window_bounds = array<i64: 1, 8, 128>}, {transform_indices = @transform_2, window_bounds = array<i64: 1, 8, 1>}, {transform_indices = @transform_3, window_bounds = array<i64: 1, 8, 1>}, {transform_indices = @transform_4, window_bounds = array<i64: 128, 128>}, {transform_indices = @transform_5, window_bounds = array<i64: 1, 128>}, {transform_indices = @transform_6, window_bounds = array<i64: 1, 8, 128>}]} {
    %c0_i32 = arith.constant 0 : i32
    %0 = arith.cmpi eq, %arg1, %c0_i32 : i32
    %1 = arith.extui %0 : i1 to i32
    %c0_i32_0 = arith.constant 0 : i32
    %2 = arith.cmpi ne, %1, %c0_i32_0 : i32
    scf.if %2 {
      %cst_34 = arith.constant 0xFF800000 : f32
      %54 = vector.broadcast %cst_34 : f32 to vector<16x1xf32>
      %c0_35 = arith.constant 0 : index
      %c0_36 = arith.constant 0 : index
      %55 = vector.load %arg9[%c0_35, %c0_36] : memref<16x1xf32, #tpu.memory_space<vmem>>, vector<16x1xf32>
      tpu.vector_store %arg9[%c0_35, %c0_36], %54 {strides = array<i32>} : memref<16x1xf32, #tpu.memory_space<vmem>>, vector<16x1xf32>,
      %cst_37 = arith.constant 0.000000e+00 : f32
      %56 = vector.broadcast %cst_37 : f32 to vector<16x1xf32>
      %c0_38 = arith.constant 0 : index
      %c0_39 = arith.constant 0 : index
      %57 = vector.load %arg10[%c0_38, %c0_39] : memref<16x1xf32, #tpu.memory_space<vmem>>, vector<16x1xf32>
      tpu.vector_store %arg10[%c0_38, %c0_39], %56 {strides = array<i32>} : memref<16x1xf32, #tpu.memory_space<vmem>>, vector<16x1xf32>,
      %cst_40 = arith.constant 0.000000e+00 : f32
      %58 = vector.broadcast %cst_40 : f32 to vector<16x1xf32>
      %c0_41 = arith.constant 0 : index
      %c0_42 = arith.constant 0 : index
      %59 = vector.load %arg11[%c0_41, %c0_42] : memref<16x1xf32, #tpu.memory_space<vmem>>, vector<16x1xf32>
      tpu.vector_store %arg11[%c0_41, %c0_42], %58 {strides = array<i32>} : memref<16x1xf32, #tpu.memory_space<vmem>>, vector<16x1xf32>,
    } else {
    }
    %c0 = arith.constant 0 : index
    %c0_1 = arith.constant 0 : index
    %c0_2 = arith.constant 0 : index
    %3 = vector.load %arg2[%c0, %c0_1, %c0_2] : memref<1x8x128xf32, #tpu.memory_space<vmem>>, vector<1x8x128xf32>
    %4 = vector.shape_cast %3 : vector<1x8x128xf32> to vector<8x128xf32>
    %c0_3 = arith.constant 0 : index
    %c0_4 = arith.constant 0 : index
    %c0_5 = arith.constant 0 : index
    %5 = vector.load %arg3[%c0_3, %c0_4, %c0_5] : memref<1x8x128xf32, #tpu.memory_space<vmem>>, vector<1x8x128xf32>
    %6 = vector.shape_cast %5 : vector<1x8x128xf32> to vector<8x128xf32>
    %7 = tpu.concatenate %4, %6 in 0 : vector<8x128xf32>, vector<8x128xf32> -> vector<16x128xf32>
    %c0_6 = arith.constant 0 : index
    %c0_7 = arith.constant 0 : index
    %c0_8 = arith.constant 0 : index
    %8 = vector.load %arg4[%c0_6, %c0_7, %c0_8] : memref<1x8x1xi32, #tpu.memory_space<vmem>>, vector<1x8x1xi32>
    %9 = vector.shape_cast %8 : vector<1x8x1xi32> to vector<8x1xi32>
    %c0_9 = arith.constant 0 : index
    %c0_10 = arith.constant 0 : index
    %c0_11 = arith.constant 0 : index
    %10 = vector.load %arg5[%c0_9, %c0_10, %c0_11] : memref<1x8x1xi32, #tpu.memory_space<vmem>>, vector<1x8x1xi32>
    %11 = vector.shape_cast %10 : vector<1x8x1xi32> to vector<8x1xi32>
    %12 = tpu.concatenate %9, %11 in 0 : vector<8x1xi32>, vector<8x1xi32> -> vector<16x1xi32>
    %c-100_i32 = arith.constant -100 : i32
    %13 = vector.broadcast %c-100_i32 : i32 to vector<16x1xi32>
    %14 = arith.cmpi ne, %12, %13 : vector<16x1xi32>
    %c0_i32_12 = arith.constant 0 : i32
    %15 = vector.broadcast %c0_i32_12 : i32 to vector<16x1xi32>
    %16 = arith.select %14, %12, %15 : vector<16x1xi1>, vector<16x1xi32>
    %c0_13 = arith.constant 0 : index
    %c0_14 = arith.constant 0 : index
    %17 = vector.load %arg6[%c0_13, %c0_14] : memref<128x128xf32, #tpu.memory_space<vmem>>, vector<128x128xf32>
    %cst = arith.constant dense<0.000000e+00> : vector<16x128xf32>
    %18 = tpu.matmul %7, %17, %cst {dimension_numbers = #tpu.dot_dimension_numbers<[1], [1], [0], [0], [0, 0, 1, 0], [], []>} : vector<16x128xf32>, vector<128x128xf32>, vector<16x128xf32> -> vector<16x128xf32>
    %c0_15 = arith.constant 0 : index
    %c0_16 = arith.constant 0 : index
    %19 = vector.load %arg7[%c0_15, %c0_16] : memref<1x128xf32, #tpu.memory_space<vmem>>, vector<1x128xf32>
    %20 = vector.broadcast %19 : vector<1x128xf32> to vector<16x128xf32>
    %21 = arith.addf %18, %20 : vector<16x128xf32>
    %c0_17 = arith.constant 0 : index
    %c0_18 = arith.constant 0 : index
    %22 = vector.load %arg9[%c0_17, %c0_18] : memref<16x1xf32, #tpu.memory_space<vmem>>, vector<16x1xf32>
    %cst_19 = arith.constant dense<0xFF800000> : vector<16xf32>
    %23 = vector.multi_reduction <maximumf>, %21, %cst_19 [1] : vector<16x128xf32> to vector<16xf32>
    %24 = vector.shape_cast %23 : vector<16xf32> to vector<16x1xf32>
    %25 = arith.maximumf %22, %24 : vector<16x1xf32>
    %26 = arith.subf %22, %25 : vector<16x1xf32>
    %27 = math.exp %26 : vector<16x1xf32>
    %c0_20 = arith.constant 0 : index
    %c0_21 = arith.constant 0 : index
    %28 = vector.load %arg10[%c0_20, %c0_21] : memref<16x1xf32, #tpu.memory_space<vmem>>, vector<16x1xf32>
    %29 = arith.mulf %28, %27 : vector<16x1xf32>
    %30 = vector.broadcast %25 : vector<16x1xf32> to vector<16x128xf32>
    %31 = arith.subf %21, %30 : vector<16x128xf32>
    %32 = math.exp %31 : vector<16x128xf32>
    %cst_22 = arith.constant dense<0.000000e+00> : vector<16xf32>
    %33 = vector.multi_reduction <add>, %32, %cst_22 [1] : vector<16x128xf32> to vector<16xf32>
    %34 = vector.shape_cast %33 : vector<16xf32> to vector<16x1xf32>
    %35 = arith.addf %29, %34 : vector<16x1xf32>
    %c0_23 = arith.constant 0 : index
    %c0_24 = arith.constant 0 : index
    %36 = vector.load %arg10[%c0_23, %c0_24] : memref<16x1xf32, #tpu.memory_space<vmem>>, vector<16x1xf32>
    tpu.vector_store %arg10[%c0_23, %c0_24], %35 {strides = array<i32>} : memref<16x1xf32, #tpu.memory_space<vmem>>, vector<16x1xf32>,
    %c0_25 = arith.constant 0 : index
    %c0_26 = arith.constant 0 : index
    %37 = vector.load %arg9[%c0_25, %c0_26] : memref<16x1xf32, #tpu.memory_space<vmem>>, vector<16x1xf32>
    tpu.vector_store %arg9[%c0_25, %c0_26], %25 {strides = array<i32>} : memref<16x1xf32, #tpu.memory_space<vmem>>, vector<16x1xf32>,
    %38 = tpu.iota {dimensions = array<i32: 1>} : vector<16x128xi32>
    %c128_i32 = arith.constant 128 : i32
    %39 = arith.muli %arg1, %c128_i32 : i32
    %40 = vector.broadcast %39 : i32 to vector<16x128xi32>
    %41 = arith.addi %38, %40 : vector<16x128xi32>
    %42 = vector.broadcast %16 : vector<16x1xi32> to vector<16x128xi32>
    %43 = arith.cmpi eq, %41, %42 : vector<16x128xi32>
    %c0_27 = arith.constant 0 : index
    %c0_28 = arith.constant 0 : index
    %44 = vector.load %arg11[%c0_27, %c0_28] : memref<16x1xf32, #tpu.memory_space<vmem>>, vector<16x1xf32>
    %cst_29 = arith.constant 0.000000e+00 : f32
    %45 = vector.broadcast %cst_29 : f32 to vector<16x128xf32>
    %46 = arith.select %43, %21, %45 : vector<16x128xi1>, vector<16x128xf32>
    %cst_30 = arith.constant dense<0.000000e+00> : vector<16xf32>
    %47 = vector.multi_reduction <add>, %46, %cst_30 [1] : vector<16x128xf32> to vector<16xf32>
    %48 = vector.shape_cast %47 : vector<16xf32> to vector<16x1xf32>
    %49 = arith.addf %44, %48 : vector<16x1xf32>
    %c0_31 = arith.constant 0 : index
    %c0_32 = arith.constant 0 : index
    %50 = vector.load %arg11[%c0_31, %c0_32] : memref<16x1xf32, #tpu.memory_space<vmem>>, vector<16x1xf32>
    tpu.vector_store %arg11[%c0_31, %c0_32], %49 {strides = array<i32>} : memref<16x1xf32, #tpu.memory_space<vmem>>, vector<16x1xf32>,
    %c3_i32 = arith.constant 3 : i32
    %51 = arith.cmpi eq, %arg1, %c3_i32 : i32
    %52 = arith.extui %51 : i1 to i32
    %c0_i32_33 = arith.constant 0 : i32
    %53 = arith.cmpi ne, %52, %c0_i32_33 : i32
    scf.if %53 {
      %c0_34 = arith.constant 0 : index
      %c0_35 = arith.constant 0 : index
      %54 = vector.load %arg9[%c0_34, %c0_35] : memref<16x1xf32, #tpu.memory_space<vmem>>, vector<16x1xf32>
      %c0_36 = arith.constant 0 : index
      %c0_37 = arith.constant 0 : index
      %55 = vector.load %arg10[%c0_36, %c0_37] : memref<16x1xf32, #tpu.memory_space<vmem>>, vector<16x1xf32>
      %56 = math.log %55 : vector<16x1xf32>
      %57 = arith.addf %54, %56 : vector<16x1xf32>
      %c0_38 = arith.constant 0 : index
      %c0_39 = arith.constant 0 : index
      %58 = vector.load %arg11[%c0_38, %c0_39] : memref<16x1xf32, #tpu.memory_space<vmem>>, vector<16x1xf32>
      %59 = arith.subf %58, %57 : vector<16x1xf32>
      %60 = arith.extui %14 : vector<16x1xi1> to vector<16x1xi32>
      %61 = arith.sitofp %60 : vector<16x1xi32> to vector<16x1xf32>
      %62 = arith.mulf %59, %61 : vector<16x1xf32>
      %63 = vector.extract_strided_slice %62 {offsets = [0, 0], sizes = [8, 1], strides = [1, 1]} : vector<16x1xf32> to vector<8x1xf32>
      %64 = vector.shape_cast %63 : vector<8x1xf32> to vector<1x8x1xf32>
      %cst_40 = arith.constant dense<0.000000e+00> : vector<1xf32>
      %65 = vector.multi_reduction <add>, %64, %cst_40 [1, 2] : vector<1x8x1xf32> to vector<1xf32>
      %66 = vector.shape_cast %65 : vector<1xf32> to vector<1x1x1xf32>
      %67 = vector.extract %66[0, 0, 0] : f32 from vector<1x1x1xf32>
      %68 = vector.extract_strided_slice %62 {offsets = [8, 0], sizes = [8, 1], strides = [1, 1]} : vector<16x1xf32> to vector<8x1xf32>
      %69 = vector.shape_cast %68 : vector<8x1xf32> to vector<1x8x1xf32>
      %cst_41 = arith.constant dense<0.000000e+00> : vector<1xf32>
      %70 = vector.multi_reduction <add>, %69, %cst_41 [1, 2] : vector<1x8x1xf32> to vector<1xf32>
      %71 = vector.shape_cast %70 : vector<1xf32> to vector<1x1x1xf32>
      %72 = vector.extract %71[0, 0, 0] : f32 from vector<1x1x1xf32>
      %73 = vector.extract_strided_slice %61 {offsets = [0, 0], sizes = [8, 1], strides = [1, 1]} : vector<16x1xf32> to vector<8x1xf32>
      %74 = vector.shape_cast %73 : vector<8x1xf32> to vector<1x8x1xf32>
      %cst_42 = arith.constant dense<0.000000e+00> : vector<1xf32>
      %75 = vector.multi_reduction <add>, %74, %cst_42 [1, 2] : vector<1x8x1xf32> to vector<1xf32>
      %76 = vector.shape_cast %75 : vector<1xf32> to vector<1x1x1xf32>
      %77 = vector.extract %76[0, 0, 0] : f32 from vector<1x1x1xf32>
      %78 = vector.extract_strided_slice %61 {offsets = [8, 0], sizes = [8, 1], strides = [1, 1]} : vector<16x1xf32> to vector<8x1xf32>
      %79 = vector.shape_cast %78 : vector<8x1xf32> to vector<1x8x1xf32>
      %cst_43 = arith.constant dense<0.000000e+00> : vector<1xf32>
      %80 = vector.multi_reduction <add>, %79, %cst_43 [1, 2] : vector<1x8x1xf32> to vector<1xf32>
      %81 = vector.shape_cast %80 : vector<1xf32> to vector<1x1x1xf32>
      %82 = vector.extract %81[0, 0, 0] : f32 from vector<1x1x1xf32>
      %cst_44 = arith.constant 1.000000e+00 : f32
      %83 = arith.maximumf %77, %cst_44 : f32
      %84 = arith.divf %67, %83 : f32
      %cst_45 = arith.constant 1.000000e+00 : f32
      %85 = arith.maximumf %82, %cst_45 : f32
      %86 = arith.divf %72, %85 : f32
      %87 = arith.subf %84, %86 : f32
      %cst_46 = arith.constant 1.000000e-01 : f32
      %88 = arith.mulf %cst_46, %87 : f32
      %cst_47 = arith.constant 5.000000e-01 : f32
      %89 = arith.subf %88, %cst_47 : f32
      %cst_48 = arith.constant 0.000000e+00 : f32
      %90 = arith.subf %cst_48, %89 : f32
      %cst_49 = arith.constant 0.000000e+00 : f32
      %91 = arith.maximumf %90, %cst_49 : f32
      %92 = math.absf %89 : f32
      %cst_50 = arith.constant 0.000000e+00 : f32
      %93 = arith.subf %cst_50, %92 : f32
      %94 = math.exp %93 : f32
      %95 = math.log1p %94 : f32
      %96 = arith.addf %91, %95 : f32
      %cst_51 = arith.constant 0.000000e+00 : f32
      %97 = arith.subf %cst_51, %96 : f32
      %cst_52 = arith.constant 0.000000e+00 : f32
      %98 = arith.subf %cst_52, %97 : f32
      %cst_53 = arith.constant 1.000000e+00 : f32
      %99 = arith.mulf %98, %cst_53 : f32
      %cst_54 = arith.constant 0.000000e+00 : f32
      %100 = arith.subf %cst_54, %89 : f32
      %cst_55 = arith.constant 0.000000e+00 : f32
      %101 = arith.subf %cst_55, %100 : f32
      %cst_56 = arith.constant 0.000000e+00 : f32
      %102 = arith.maximumf %101, %cst_56 : f32
      %103 = math.absf %100 : f32
      %cst_57 = arith.constant 0.000000e+00 : f32
      %104 = arith.subf %cst_57, %103 : f32
      %105 = math.exp %104 : f32
      %106 = math.log1p %105 : f32
      %107 = arith.addf %102, %106 : f32
      %cst_58 = arith.constant 0.000000e+00 : f32
      %108 = arith.subf %cst_58, %107 : f32
      %cst_59 = arith.constant 0.000000e+00 : f32
      %109 = arith.mulf %108, %cst_59 : f32
      %110 = arith.subf %99, %109 : f32
      %111 = tpu.iota {dimensions = array<i32: 1>} : vector<8x128xi32>
      %c0_i32_60 = arith.constant 0 : i32
      %112 = vector.broadcast %c0_i32_60 : i32 to vector<8x128xi32>
      %113 = arith.cmpi eq, %111, %112 : vector<8x128xi32>
      %114 = arith.extui %113 : vector<8x128xi1> to vector<8x128xi32>
      %115 = arith.sitofp %114 : vector<8x128xi32> to vector<8x128xf32>
      %116 = vector.broadcast %110 : f32 to vector<8x128xf32>
      %117 = arith.mulf %116, %115 : vector<8x128xf32>
      %cst_61 = arith.constant 0.000000e+00 : f32
      %118 = arith.subf %cst_61, %67 : f32
      %c1_i32 = arith.constant 1 : i32
      %119 = vector.broadcast %c1_i32 : i32 to vector<8x128xi32>
      %120 = arith.cmpi eq, %111, %119 : vector<8x128xi32>
      %121 = arith.extui %120 : vector<8x128xi1> to vector<8x128xi32>
      %122 = arith.sitofp %121 : vector<8x128xi32> to vector<8x128xf32>
      %123 = vector.broadcast %118 : f32 to vector<8x128xf32>
      %124 = arith.mulf %123, %122 : vector<8x128xf32>
      %125 = arith.addf %117, %124 : vector<8x128xf32>
      %c2_i32 = arith.constant 2 : i32
      %126 = vector.broadcast %c2_i32 : i32 to vector<8x128xi32>
      %127 = arith.cmpi eq, %111, %126 : vector<8x128xi32>
      %128 = arith.extui %127 : vector<8x128xi1> to vector<8x128xi32>
      %129 = arith.sitofp %128 : vector<8x128xi32> to vector<8x128xf32>
      %130 = vector.broadcast %77 : f32 to vector<8x128xf32>
      %131 = arith.mulf %130, %129 : vector<8x128xf32>
      %132 = arith.addf %125, %131 : vector<8x128xf32>
      %cst_62 = arith.constant 1.000000e-01 : f32
      %133 = arith.mulf %cst_62, %84 : f32
      %c3_i32_63 = arith.constant 3 : i32
      %134 = vector.broadcast %c3_i32_63 : i32 to vector<8x128xi32>
      %135 = arith.cmpi eq, %111, %134 : vector<8x128xi32>
      %136 = arith.extui %135 : vector<8x128xi1> to vector<8x128xi32>
      %137 = arith.sitofp %136 : vector<8x128xi32> to vector<8x128xf32>
      %138 = vector.broadcast %133 : f32 to vector<8x128xf32>
      %139 = arith.mulf %138, %137 : vector<8x128xf32>
      %140 = arith.addf %132, %139 : vector<8x128xf32>
      %cst_64 = arith.constant 1.000000e-01 : f32
      %141 = arith.mulf %cst_64, %86 : f32
      %c4_i32 = arith.constant 4 : i32
      %142 = vector.broadcast %c4_i32 : i32 to vector<8x128xi32>
      %143 = arith.cmpi eq, %111, %142 : vector<8x128xi32>
      %144 = arith.extui %143 : vector<8x128xi1> to vector<8x128xi32>
      %145 = arith.sitofp %144 : vector<8x128xi32> to vector<8x128xf32>
      %146 = vector.broadcast %141 : f32 to vector<8x128xf32>
      %147 = arith.mulf %146, %145 : vector<8x128xf32>
      %148 = arith.addf %140, %147 : vector<8x128xf32>
      %149 = vector.shape_cast %148 : vector<8x128xf32> to vector<1x8x128xf32>
      %c0_65 = arith.constant 0 : index
      %c0_66 = arith.constant 0 : index
      %c0_67 = arith.constant 0 : index
      %150 = vector.load %arg8[%c0_65, %c0_66, %c0_67] : memref<1x8x128xf32, #tpu.memory_space<vmem>>, vector<1x8x128xf32>
      tpu.vector_store %arg8[%c0_65, %c0_66, %c0_67], %149 {strides = array<i32>} : memref<1x8x128xf32, #tpu.memory_space<vmem>>, vector<1x8x128xf32>,
    } else {
    }
    return
  }
  func.func @transform_0(%arg0: i32, %arg1: i32) -> (i32, i32, i32) {
    %c0_i32 = arith.constant 0 : i32
    %c0_i32_0 = arith.constant 0 : i32
    %c0_i32_1 = arith.constant 0 : i32
    return %arg0, %c0_i32, %c0_i32_0 : i32, i32, i32
  }
  func.func @transform_1(%arg0: i32, %arg1: i32) -> (i32, i32, i32) {
    %c2_i32 = arith.constant 2 : i32
    %0 = arith.addi %arg0, %c2_i32 : i32
    %c0_i32 = arith.constant 0 : i32
    %c0_i32_0 = arith.constant 0 : i32
    %c0_i32_1 = arith.constant 0 : i32
    return %0, %c0_i32, %c0_i32_0 : i32, i32, i32
  }
  func.func @transform_2(%arg0: i32, %arg1: i32) -> (i32, i32, i32) {
    %c0_i32 = arith.constant 0 : i32
    %c0_i32_0 = arith.constant 0 : i32
    %c0_i32_1 = arith.constant 0 : i32
    return %arg0, %c0_i32, %c0_i32_0 : i32, i32, i32
  }
  func.func @transform_3(%arg0: i32, %arg1: i32) -> (i32, i32, i32) {
    %c2_i32 = arith.constant 2 : i32
    %0 = arith.addi %arg0, %c2_i32 : i32
    %c0_i32 = arith.constant 0 : i32
    %c0_i32_0 = arith.constant 0 : i32
    %c0_i32_1 = arith.constant 0 : i32
    return %0, %c0_i32, %c0_i32_0 : i32, i32, i32
  }
  func.func @transform_4(%arg0: i32, %arg1: i32) -> (i32, i32) {
    %c0_i32 = arith.constant 0 : i32
    %c0_i32_0 = arith.constant 0 : i32
    return %arg1, %c0_i32 : i32, i32
  }
  func.func @transform_5(%arg0: i32, %arg1: i32) -> (i32, i32) {
    %c0_i32 = arith.constant 0 : i32
    %c0_i32_0 = arith.constant 0 : i32
    return %c0_i32, %arg1 : i32, i32
  }
  func.func @transform_6(%arg0: i32, %arg1: i32) -> (i32, i32, i32) {
    %c0_i32 = arith.constant 0 : i32
    %c0_i32_0 = arith.constant 0 : i32
    %c0_i32_1 = arith.constant 0 : i32
    return %arg0, %c0_i32, %c0_i32_0 : i32, i32, i32
  }
}

</mosaic_0001>

<llo_original>
// kernel: tpu_custom_call.1
$region0: #{tpu_custom_call.1}
  #allocation0 [shape = 'u32[]', space=smem, size = 0x4, offset = 0x4, fixed_abs, tag = 'smem constant byte address 0x4 - core index']
  #allocation1 [shape = 'u32[144,128]{1,0:T(1,128)}', space=vmem, size = 0x12000, scoped, tag = 'internal scratch']
  #allocation2 [shape = 'f32[16,1]{1,0:T(8,128)}', space=vmem, size = 0x2000, scoped, tag = 'scratch operand']
  #allocation3 [shape = 'f32[16,1]{1,0:T(8,128)}', space=vmem, size = 0x2000, scoped, tag = 'scratch operand']
  #allocation4 [shape = 'f32[16,1]{1,0:T(8,128)}', space=vmem, size = 0x2000, scoped, tag = 'scratch operand']
  %s0 = inlined_call_operand.vmem [shape: f32[4,8,128], index: 0, kind: input, shape index: {}]
  %s1 = inlined_call_operand.vmem [shape: f32[4,8,128], index: 1, kind: input, shape index: {}]
  %s2 = inlined_call_operand.vmem [shape: s32[4,8,1], index: 2, kind: input, shape index: {}]
  %s3 = inlined_call_operand.vmem [shape: s32[4,8,1], index: 3, kind: input, shape index: {}]
  %s4 = inlined_call_operand.hbm [shape: f32[512,128], index: 4, kind: input, shape index: {}]
  %s5 = inlined_call_operand.vmem [shape: f32[1,512], index: 5, kind: input, shape index: {}]
  %s6 = inlined_call_operand.hbm [shape: f32[2,8,128], index: 6, kind: output, shape index: {}]
  %s7 = sld [smem:[#allocation0]]
  $region69: #{tpu_custom_call.1} parent=0
    _
  %s9 = ssub.s32 1, %s7
  %s10 = scalar_select 0, %s9, %s7
  $region1: #{tpu_custom_call.1} parent=0
    #allocation5 [shape = 'u8[131072]{0}', space=vmem, size = 0x20000, scoped, tag = 'input window, operand 4']
    #allocation6 [shape = 's32[2]{0}', space=sflag, size = 0x8, scoped, tag = 'scoped memory for tpu_custom_call.1']
    #allocation7 [shape = 's32[2]{0}', space=sflag, size = 0x8, scoped, tag = 'scoped memory for tpu_custom_call.1']
    #allocation8 [shape = 'u8[8192]{0}', space=vmem, size = 0x2000, scoped, tag = 'output window, operand 0']
    %11 = vsyncpa [#allocation6], 0
    %s12 = scalar_lea.sflag [#allocation6], 1
    %13 = vsyncpa %s12, 0
    %14 = vsyncpa [#allocation7], 0
    %s15 = scalar_lea.sflag [#allocation7], 1
    %16 = vsyncpa %s15, 0
    loop: start=0, step=1, limit=10
    $region2: #{tpu_custom_call.1} parent=1 // loop_pre_header
      _
    $region3: #{tpu_custom_call.1} parent=1 // loop_header
      %s18 = sphi 0, %s22
      %p19 = scmp.ge.s32.totalorder %s18, 10
      %s25 = sphi 0, %s37
      %s26 = sphi 0, %s33
      %s27 = sphi 0, %s25
      %s28 = sphi 0, %s26
      %s29 = sphi 0, %s27
      %s30 = sphi 0, %s28
      %s40 = sphi 0, %s42
      %s43 = sphi 0, %s40
      %s44 = sphi 0, %s43
      %s60 = sphi 0, %s44
      %s68 = sphi 0, %s70
      %s71 = sphi 0, %s68
      %s72 = sphi 0, %s71
      %s88 = sphi 0, %s72
      %s94 = sphi 0, %s96
      %s97 = sphi 0, %s94
      %s98 = sphi 0, %s97
      %s114 = sphi 0, %s98
      %s122 = sphi 0, %s124
      %s125 = sphi 0, %s122
      %s126 = sphi 0, %s125
      %s142 = sphi 0, %s126
      %s148 = sphi 0, %s150
      %s151 = sphi 0, %s148
      %s152 = sphi 0, %s151
      %s168 = sphi 0, %s152
      %s174 = sphi 0, %s176
      %s177 = sphi 0, %s174
      %s178 = sphi 0, %s177
      %s194 = sphi 0, %s178
      %s200 = sphi 0, %s202
      %s203 = sphi 0, %s200
      %s204 = sphi 0, %s203
      %s220 = sphi 0, %s204
    $region4: #{tpu_custom_call.1} parent=1 // loop_header_branch
      %21 = sbr.rel (%p19) target = $region8
    $region5: #{tpu_custom_call.1} parent=1 // loop_body
      %s23 = ssub.s32 %s18, 1
      %s24 = ssub.s32 %s18, 2
      %s31 = sadd.s32 1, %s26
      %p32 = scmp.ge.s32.totalorder %s31, 4
      %s33 = scalar_select %p32, 0, %s31
      %s34 = sadd.s32 1, %s25
      %s35 = scalar_select %p32, %s34, %s25
      %p36 = scmp.ge.s32.totalorder %s35, 2
      %s37 = scalar_select %p36, 0, %s35
      %s38 = ssub.s32 %s25, %s37
      %p39 = scmp.eq.s32.totalorder %s38, 0
      %s41 = sadd.s32 %s40, 1
      %s42 = scalar_select %p39, %s40, %s41
      %p45 = pneg %p39
      %p46 = scmp.eq.s32.totalorder %s18, 7
      %p47 = por %p45, %p46
      %p48 = scmp.ne.s32.totalorder %s40, %s43
      %p49 = scmp.eq.s32.totalorder %s18, 0
      %p50 = por %p48, %p49
      %p51 = scmp.ne.s32.totalorder %s40, %s43
      %p52 = scmp.eq.s32.totalorder %s23, 7
      %p53 = por %p51, %p52
      %p54 = scmp.ne.s32.totalorder %s43, %s44
      %p55 = scmp.eq.s32.totalorder %s23, 0
      %p56 = por %p54, %p55
      %p57 = scmp.ne.s32.totalorder %s43, %s44
      %p58 = scmp.eq.s32.totalorder %s24, 7
      %p59 = por %p57, %p58
      %p61 = scmp.ne.s32.totalorder %s44, %s60
      %p62 = scmp.eq.s32.totalorder %s24, 0
      %p63 = por %p61, %p62
      %s64 = sadd.s32 %s25, 2
      %s65 = sadd.s32 %s37, 2
      %s66 = ssub.s32 %s64, %s65
      %p67 = scmp.eq.s32.totalorder %s66, 0
      %s69 = sadd.s32 %s68, 1
      %s70 = scalar_select %p67, %s68, %s69
      %p73 = pneg %p67
      %p74 = scmp.eq.s32.totalorder %s18, 7
      %p75 = por %p73, %p74
      %p76 = scmp.ne.s32.totalorder %s68, %s71
      %p77 = scmp.eq.s32.totalorder %s18, 0
      %p78 = por %p76, %p77
      %p79 = scmp.ne.s32.totalorder %s68, %s71
      %p80 = scmp.eq.s32.totalorder %s23, 7
      %p81 = por %p79, %p80
      %p82 = scmp.ne.s32.totalorder %s71, %s72
      %p83 = scmp.eq.s32.totalorder %s23, 0
      %p84 = por %p82, %p83
      %p85 = scmp.ne.s32.totalorder %s71, %s72
      %p86 = scmp.eq.s32.totalorder %s24, 7
      %p87 = por %p85, %p86
      %p89 = scmp.ne.s32.totalorder %s72, %s88
      %p90 = scmp.eq.s32.totalorder %s24, 0
      %p91 = por %p89, %p90
      %s92 = ssub.s32 %s25, %s37
      %p93 = scmp.eq.s32.totalorder %s92, 0
      %s95 = sadd.s32 %s94, 1
      %s96 = scalar_select %p93, %s94, %s95
      %p99 = pneg %p93
      %p100 = scmp.eq.s32.totalorder %s18, 7
      %p101 = por %p99, %p100
      %p102 = scmp.ne.s32.totalorder %s94, %s97
      %p103 = scmp.eq.s32.totalorder %s18, 0
      %p104 = por %p102, %p103
      %p105 = scmp.ne.s32.totalorder %s94, %s97
      %p106 = scmp.eq.s32.totalorder %s23, 7
      %p107 = por %p105, %p106
      %p108 = scmp.ne.s32.totalorder %s97, %s98
      %p109 = scmp.eq.s32.totalorder %s23, 0
      %p110 = por %p108, %p109
      %p111 = scmp.ne.s32.totalorder %s97, %s98
      %p112 = scmp.eq.s32.totalorder %s24, 7
      %p113 = por %p111, %p112
      %p115 = scmp.ne.s32.totalorder %s98, %s114
      %p116 = scmp.eq.s32.totalorder %s24, 0
      %p117 = por %p115, %p116
      %s118 = sadd.s32 %s25, 2
      %s119 = sadd.s32 %s37, 2
      %s120 = ssub.s32 %s118, %s119
      %p121 = scmp.eq.s32.totalorder %s120, 0
      %s123 = sadd.s32 %s122, 1
      %s124 = scalar_select %p121, %s122, %s123
      %p127 = pneg %p121
      %p128 = scmp.eq.s32.totalorder %s18, 7
      %p129 = por %p127, %p128
      %p130 = scmp.ne.s32.totalorder %s122, %s125
      %p131 = scmp.eq.s32.totalorder %s18, 0
      %p132 = por %p130, %p131
      %p133 = scmp.ne.s32.totalorder %s122, %s125
      %p134 = scmp.eq.s32.totalorder %s23, 7
      %p135 = por %p133, %p134
      %p136 = scmp.ne.s32.totalorder %s125, %s126
      %p137 = scmp.eq.s32.totalorder %s23, 0
      %p138 = por %p136, %p137
      %p139 = scmp.ne.s32.totalorder %s125, %s126
      %p140 = scmp.eq.s32.totalorder %s24, 7
      %p141 = por %p139, %p140
      %p143 = scmp.ne.s32.totalorder %s126, %s142
      %p144 = scmp.eq.s32.totalorder %s24, 0
      %p145 = por %p143, %p144
      %s146 = ssub.s32 %s26, %s33
      %p147 = scmp.eq.s32.totalorder %s146, 0
      %s149 = sadd.s32 %s148, 1
      %s150 = scalar_select %p147, %s148, %s149
      %p153 = pneg %p147
      %p154 = scmp.eq.s32.totalorder %s18, 7
      %p155 = por %p153, %p154
      %p156 = scmp.ne.s32.totalorder %s148, %s151
      %p157 = scmp.eq.s32.totalorder %s18, 0
      %p158 = por %p156, %p157
      %p159 = scmp.ne.s32.totalorder %s148, %s151
      %p160 = scmp.eq.s32.totalorder %s23, 7
      %p161 = por %p159, %p160
      %p162 = scmp.ne.s32.totalorder %s151, %s152
      %p163 = scmp.eq.s32.totalorder %s23, 0
      %p164 = por %p162, %p163
      %p165 = scmp.ne.s32.totalorder %s151, %s152
      %p166 = scmp.eq.s32.totalorder %s24, 7
      %p167 = por %p165, %p166
      %p169 = scmp.ne.s32.totalorder %s152, %s168
      %p170 = scmp.eq.s32.totalorder %s24, 0
      %p171 = por %p169, %p170
      %s172 = ssub.s32 %s26, %s33
      %p173 = scmp.eq.s32.totalorder %s172, 0
      %s175 = sadd.s32 %s174, 1
      %s176 = scalar_select %p173, %s174, %s175
      %p179 = pneg %p173
      %p180 = scmp.eq.s32.totalorder %s18, 7
      %p181 = por %p179, %p180
      %p182 = scmp.ne.s32.totalorder %s174, %s177
      %p183 = scmp.eq.s32.totalorder %s18, 0
      %p184 = por %p182, %p183
      %p185 = scmp.ne.s32.totalorder %s174, %s177
      %p186 = scmp.eq.s32.totalorder %s23, 7
      %p187 = por %p185, %p186
      %p188 = scmp.ne.s32.totalorder %s177, %s178
      %p189 = scmp.eq.s32.totalorder %s23, 0
      %p190 = por %p188, %p189
      %p191 = scmp.ne.s32.totalorder %s177, %s178
      %p192 = scmp.eq.s32.totalorder %s24, 7
      %p193 = por %p191, %p192
      %p195 = scmp.ne.s32.totalorder %s178, %s194
      %p196 = scmp.eq.s32.totalorder %s24, 0
      %p197 = por %p195, %p196
      %s198 = ssub.s32 %s25, %s37
      %p199 = scmp.eq.s32.totalorder %s198, 0
      %s201 = sadd.s32 %s200, 1
      %s202 = scalar_select %p199, %s200, %s201
      %p205 = pneg %p199
      %p206 = scmp.eq.s32.totalorder %s18, 7
      %p207 = por %p205, %p206
      %p208 = scmp.ne.s32.totalorder %s200, %s203
      %p209 = scmp.eq.s32.totalorder %s18, 0
      %p210 = por %p208, %p209
      %p211 = scmp.ne.s32.totalorder %s200, %s203
      %p212 = scmp.eq.s32.totalorder %s23, 7
      %p213 = por %p211, %p212
      %p214 = scmp.ne.s32.totalorder %s203, %s204
      %p215 = scmp.eq.s32.totalorder %s23, 0
      %p216 = por %p214, %p215
      %p217 = scmp.ne.s32.totalorder %s203, %s204
      %p218 = scmp.eq.s32.totalorder %s24, 7
      %p219 = por %p217, %p218
      %p221 = scmp.ne.s32.totalorder %s204, %s220
      %p222 = scmp.eq.s32.totalorder %s24, 0
      %p223 = por %p221, %p222
      %p224 = scmp.le.s32.totalorder 1, %s18
      %p225 = scmp.lt.s32.totalorder %s18, 9
      %p226 = pnand %p224, %p225
      %p227 = pneg %p226
      // Predicated region
      $region9: #{tpu_custom_call.1} parent=5 // pred_check
        _
      $region10: #{tpu_custom_call.1} parent=5 // pred_check_branch
        %229 = sbr.rel (%p226) target = $region12
      $region11: #{tpu_custom_call.1} parent=5 // pred_region
        %s230 = ssub.s32 %s18, 1
      $region12: #{tpu_custom_call.1} parent=5 // pred_fallthru
        _
      %p231 = scmp.lt.s32.totalorder %s18, 8
      // Predicated region
      $region13: #{tpu_custom_call.1} parent=5 // pred_check
        %p232 = pneg %p231
      $region14: #{tpu_custom_call.1} parent=5 // pred_check_branch
        %234 = sbr.rel (%p232) target = $region16
      $region15: #{tpu_custom_call.1} parent=5 // pred_region
        // Predicated region
        $region17: #{tpu_custom_call.1} parent=15 // pred_check
          %p235 = pneg %p50
        $region18: #{tpu_custom_call.1} parent=15 // pred_check_branch
          %237 = sbr.rel (%p235) target = $region20
        $region19: #{tpu_custom_call.1} parent=15 // pred_region
          %p238 = scmp.lt.s32.totalorder %s25, 3
          %s239 = scalar_select %p238, %s25, 3
          %s240 = smul.addr %s239, 8
          %s241 = scalar_lea.vmem %s0, %s240
        $region20: #{tpu_custom_call.1} parent=15 // pred_fallthru
          _
        // Predicated region
        $region21: #{tpu_custom_call.1} parent=15 // pred_check
          %p242 = pneg %p78
        $region22: #{tpu_custom_call.1} parent=15 // pred_check_branch
          %244 = sbr.rel (%p242) target = $region24
        $region23: #{tpu_custom_call.1} parent=15 // pred_region
          %s245 = sadd.s32 %s25, 2
          %p246 = scmp.lt.s32.totalorder %s245, 3
          %s247 = scalar_select %p246, %s245, 3
          %s248 = smul.addr %s247, 8
          %s249 = scalar_lea.vmem %s1, %s248
          %s250 = sadd.s32 %s25, 2
        $region24: #{tpu_custom_call.1} parent=15 // pred_fallthru
          _
        // Predicated region
        $region25: #{tpu_custom_call.1} parent=15 // pred_check
          %p251 = pneg %p104
        $region26: #{tpu_custom_call.1} parent=15 // pred_check_branch
          %253 = sbr.rel (%p251) target = $region28
        $region27: #{tpu_custom_call.1} parent=15 // pred_region
          %p254 = scmp.lt.s32.totalorder %s25, 3
          %s255 = scalar_select %p254, %s25, 3
          %s256 = smul.addr %s255, 8
          %s257 = scalar_lea.vmem %s2, %s256
        $region28: #{tpu_custom_call.1} parent=15 // pred_fallthru
          _
        // Predicated region
        $region29: #{tpu_custom_call.1} parent=15 // pred_check
          %p258 = pneg %p132
        $region30: #{tpu_custom_call.1} parent=15 // pred_check_branch
          %260 = sbr.rel (%p258) target = $region32
        $region31: #{tpu_custom_call.1} parent=15 // pred_region
          %s261 = sadd.s32 %s25, 2
          %p262 = scmp.lt.s32.totalorder %s261, 3
          %s263 = scalar_select %p262, %s261, 3
          %s264 = smul.addr %s263, 8
          %s265 = scalar_lea.vmem %s3, %s264
          %s266 = sadd.s32 %s25, 2
        $region32: #{tpu_custom_call.1} parent=15 // pred_fallthru
          _
        // Predicated region
        $region33: #{tpu_custom_call.1} parent=15 // pred_check
          %p267 = pneg %p158
        $region34: #{tpu_custom_call.1} parent=15 // pred_check_branch
          %269 = sbr.rel (%p267) target = $region36
        $region35: #{tpu_custom_call.1} parent=15 // pred_region
          %s270 = sand.u32 %s148, 1
          %s271 = scalar_lea.sflag [#allocation6], %s270
          %s272 = sand.u32 %s148, 1
          %s273 = smul.addr %s272, 128
          %s274 = scalar_lea.vmem [#allocation5], %s273
          %s275 = smul.u32 16, %s26
          %s277 = ssub.s32 2048, 2048
          %278 = vsyncadd %s271, %s277
          %s279 = smul.addr %s275, 128
          %s280 = scalar_lea.hbm %s4, %s279
          %s281 = sshll.u32 %s274, 4
          %s282 = int_to_ptr.vmem [resolvable:$true] %s281
          %287 = dma.hbm_to_vmem [thread:$0]  %s280, 2048, %s282, %s271, 128, 128, 8
        $region36: #{tpu_custom_call.1} parent=15 // pred_fallthru
          _
        // Predicated region
        $region37: #{tpu_custom_call.1} parent=15 // pred_check
          %p288 = pneg %p184
        $region38: #{tpu_custom_call.1} parent=15 // pred_check_branch
          %290 = sbr.rel (%p288) target = $region40
        $region39: #{tpu_custom_call.1} parent=15 // pred_region
          %p291 = scmp.lt.s32.totalorder %s26, 3
          %s292 = scalar_select %p291, %s26, 3
          %s293 = scalar_lea.vmem %s5, %s292
        $region40: #{tpu_custom_call.1} parent=15 // pred_fallthru
          _
      $region16: #{tpu_custom_call.1} parent=5 // pred_fallthru
        _
      %p294 = scmp.le.s32.totalorder 1, %s18
      %p295 = scmp.lt.s32.totalorder %s18, 9
      %p296 = pnand %p294, %p295
      %p297 = pneg %p296
      // Predicated region
      $region41: #{tpu_custom_call.1} parent=5 // pred_check
        _
      $region42: #{tpu_custom_call.1} parent=5 // pred_check_branch
        %299 = sbr.rel (%p296) target = $region44
      $region43: #{tpu_custom_call.1} parent=5 // pred_region
        %s300 = ssub.s32 %s18, 1
        %s301 = sand.u32 %s151, 1
        %s302 = scalar_lea.sflag [#allocation6], %s301
        %s303 = sand.u32 %s151, 1
        %s304 = smul.addr %s303, 128
        %s305 = scalar_lea.vmem [#allocation5], %s304
        // Predicated region
        $region45: #{tpu_custom_call.1} parent=43 // pred_check
          %p306 = pneg %p164
        $region46: #{tpu_custom_call.1} parent=43 // pred_check_branch
          %308 = sbr.rel (%p306) target = $region48
        $region47: #{tpu_custom_call.1} parent=43 // pred_region
          %309 = dma.done %s302, 2048
        $region48: #{tpu_custom_call.1} parent=43 // pred_fallthru
          _
        %p310 = scmp.lt.s32.totalorder %s27, 3
        %s311 = scalar_select %p310, %s27, 3
        %s312 = smul.addr %s311, 8
        %s313 = scalar_lea.vmem %s0, %s312
        %p314 = pneg %p56
        %p315 = pneg %p53
        %s316 = sadd.s32 %s27, 2
        %p317 = scmp.lt.s32.totalorder %s316, 3
        %s318 = scalar_select %p317, %s316, 3
        %s319 = smul.addr %s318, 8
        %s320 = scalar_lea.vmem %s1, %s319
        %p321 = pneg %p84
        %p322 = pneg %p81
        %p323 = scmp.lt.s32.totalorder %s27, 3
        %s324 = scalar_select %p323, %s27, 3
        %s325 = smul.addr %s324, 8
        %s326 = scalar_lea.vmem %s2, %s325
        %p327 = pneg %p110
        %p328 = pneg %p107
        %s329 = sadd.s32 %s27, 2
        %p330 = scmp.lt.s32.totalorder %s329, 3
        %s331 = scalar_select %p330, %s329, 3
        %s332 = smul.addr %s331, 8
        %s333 = scalar_lea.vmem %s3, %s332
        %p334 = pneg %p138
        %p335 = pneg %p135
        %s336 = sand.u32 %s151, 1
        %s337 = scalar_lea.sflag [#allocation6], %s336
        %s338 = sand.u32 %s151, 1
        %s339 = smul.addr %s338, 128
        %s340 = scalar_lea.vmem [#allocation5], %s339
        %p341 = pneg %p164
        %p342 = pneg %p161
        %p343 = scmp.lt.s32.totalorder %s28, 3
        %s344 = scalar_select %p343, %s28, 3
        %s345 = scalar_lea.vmem %s5, %s344
        %p346 = pneg %p190
        %p347 = pneg %p187
        %p348 = pneg %p216
        %p349 = pneg %p213
        %s350 = sand.u32 %s203, 1
        %s351 = scalar_lea.sflag [#allocation7], %s350
        %s352 = sand.u32 %s203, 1
        %s353 = smul.addr %s352, 8
        %s354 = scalar_lea.vmem [#allocation8], %s353
        %p355 = scmp.lt.s32.totalorder %s27, 3
        %s356 = scalar_select %p355, %s27, 3
        %s357 = smul.addr %s356, 8
        %s358 = scalar_lea.vmem %s0, %s357
        %s359 = sadd.s32 %s27, 2
        %p360 = scmp.lt.s32.totalorder %s359, 3
        %s361 = scalar_select %p360, %s359, 3
        %s362 = smul.addr %s361, 8
        %s363 = scalar_lea.vmem %s1, %s362
        %s364 = sadd.s32 %s27, 2
        %p365 = scmp.lt.s32.totalorder %s27, 3
        %s366 = scalar_select %p365, %s27, 3
        %s367 = smul.addr %s366, 8
        %s368 = scalar_lea.vmem %s2, %s367
        %s369 = sadd.s32 %s27, 2
        %p370 = scmp.lt.s32.totalorder %s369, 3
        %s371 = scalar_select %p370, %s369, 3
        %s372 = smul.addr %s371, 8
        %s373 = scalar_lea.vmem %s3, %s372
        %s374 = sadd.s32 %s27, 2
        %s375 = smul.u32 16, %s28
        %p376 = scmp.lt.s32.totalorder %s28, 3
        %s377 = scalar_select %p376, %s28, 3
        %s378 = scalar_lea.vmem %s5, %s377
        %p379 = scmp.eq.s32.totalorder %s28, 0
        // Predicated region
        $region49: #{tpu_custom_call.1} parent=43 // pred_check
          %p380 = pneg %p379
        $region50: #{tpu_custom_call.1} parent=43 // pred_check_branch
          %382 = sbr.rel (%p380) target = $region52
        $region51: #{tpu_custom_call.1} parent=43 // pred_region
          %vm383 = vcmask 7168
          %384 = vst.msk [vmem:[#allocation2] sm:$0xff] %vm383, -inf
          %385 = vst.msk [vmem:[#allocation2 + $0x8] sm:$0xff] %vm383, -inf
          %386 = vst.msk [vmem:[#allocation3] sm:$0xff] %vm383, 0.0
          %387 = vst.msk [vmem:[#allocation3 + $0x8] sm:$0xff] %vm383, 0.0
          %388 = vst.msk [vmem:[#allocation4] sm:$0xff] %vm383, 0.0
          %389 = vst.msk [vmem:[#allocation4 + $0x8] sm:$0xff] %vm383, 0.0
        $region52: #{tpu_custom_call.1} parent=43 // pred_fallthru
          _
        %v390 = vld [vmem:[%s358] sm:$0xff]
        %v391 = vld [vmem:[%s363] sm:$0xff]
        %v392 = vld [vmem:[%s368] sm:$0xff]
        %v393 = vld [vmem:[%s373] sm:$0xff]
        %vm394 = vcmp.ne.s32.totalorder %v392, 4294967196
        %vm395 = vcmp.ne.s32.totalorder %v393, 4294967196
        %v396 = vsel %vm394, %v392, 0
        %v397 = vsel %vm395, %v393, 0
        %v398 = vld [vmem:[%s305] sm:$0xff]
        %v399 = vld [vmem:[%s305 + $0x8] sm:$0xff]
        %v400 = vld [vmem:[%s305 + $0x10] sm:$0xff]
        %v401 = vld [vmem:[%s305 + $0x18] sm:$0xff]
        %v402 = vld [vmem:[%s305 + $0x20] sm:$0xff]
        %v403 = vld [vmem:[%s305 + $0x28] sm:$0xff]
        %v404 = vld [vmem:[%s305 + $0x30] sm:$0xff]
        %v405 = vld [vmem:[%s305 + $0x38] sm:$0xff]
        %v406 = vld [vmem:[%s305 + $0x40] sm:$0xff]
        %v407 = vld [vmem:[%s305 + $0x48] sm:$0xff]
        %v408 = vld [vmem:[%s305 + $0x50] sm:$0xff]
        %v409 = vld [vmem:[%s305 + $0x58] sm:$0xff]
        %v410 = vld [vmem:[%s305 + $0x60] sm:$0xff]
        %v411 = vld [vmem:[%s305 + $0x68] sm:$0xff]
        %v412 = vld [vmem:[%s305 + $0x70] sm:$0xff]
        %v413 = vld [vmem:[%s305 + $0x78] sm:$0xff]
        %v414 = vld [vmem:[%s378] sm:$0x1]
        %v416 = vlaneseq
        %v417 = vshrl.u32 %v416, 7
        %v418 = vsub.s32 0, %v417
        %v419 = vrot.slane %v414, %v418
        %421 = vmatprep.subr.mxu0 0.0
        %422 = vmatpush1.xpose.msra.mxu0 %v413
        %423 = vmatprep.subr.mxu0 0.0
        %424 = vmatpush1.xpose.msra.mxu0 %v412
        %425 = vmatprep.subr.mxu0 0.0
        %426 = vmatpush1.xpose.msra.mxu0 %v411
        %427 = vmatprep.subr.mxu0 0.0
        %428 = vmatpush1.xpose.msra.mxu0 %v410
        %429 = vmatprep.subr.mxu0 0.0
        %430 = vmatpush1.xpose.msra.mxu0 %v409
        %431 = vmatprep.subr.mxu0 0.0
        %432 = vmatpush1.xpose.msra.mxu0 %v408
        %433 = vmatprep.subr.mxu0 0.0
        %434 = vmatpush1.xpose.msra.mxu0 %v407
        %435 = vmatprep.subr.mxu0 0.0
        %436 = vmatpush1.xpose.msra.mxu0 %v406
        %437 = vmatprep.subr.mxu0 0.0
        %438 = vmatpush1.xpose.msra.mxu0 %v405
        %439 = vmatprep.subr.mxu0 0.0
        %440 = vmatpush1.xpose.msra.mxu0 %v404
        %441 = vmatprep.subr.mxu0 0.0
        %442 = vmatpush1.xpose.msra.mxu0 %v403
        %443 = vmatprep.subr.mxu0 0.0
        %444 = vmatpush1.xpose.msra.mxu0 %v402
        %445 = vmatprep.subr.mxu0 0.0
        %446 = vmatpush1.xpose.msra.mxu0 %v401
        %447 = vmatprep.subr.mxu0 0.0
        %448 = vmatpush1.xpose.msra.mxu0 %v400
        %449 = vmatprep.subr.mxu0 0.0
        %450 = vmatpush1.xpose.msra.mxu0 %v399
        %451 = vmatprep.subr.mxu0 0.0
        %452 = vmatpush1.xpose.msra.mxu0 %v398
        %453 = vmatprep.subr.mxu0 0.0
        %454 = vmatpush2.xpose.msra.mxu0 0.0
        %455 = vmatprep.subr.mxu0 0.0
        %456 = vmatpush2.xpose.msra.mxu0 0.0
        %457 = vmatprep.subr.mxu0 0.0
        %458 = vmatpush2.xpose.msra.mxu0 0.0
        %459 = vmatprep.subr.mxu0 0.0
        %460 = vmatpush2.xpose.msra.mxu0 0.0
        %461 = vmatprep.subr.mxu0 0.0
        %462 = vmatpush2.xpose.msra.mxu0 0.0
        %463 = vmatprep.subr.mxu0 0.0
        %464 = vmatpush2.xpose.msra.mxu0 0.0
        %465 = vmatprep.subr.mxu0 0.0
        %466 = vmatpush2.xpose.msra.mxu0 0.0
        %467 = vmatprep.subr.mxu0 0.0
        %468 = vmatpush2.xpose.msra.mxu0 0.0
        %469 = vmatprep.subr.mxu0 0.0
        %470 = vmatpush2.xpose.msra.mxu0 0.0
        %471 = vmatprep.subr.mxu0 0.0
        %472 = vmatpush2.xpose.msra.mxu0 0.0
        %473 = vmatprep.subr.mxu0 0.0
        %474 = vmatpush2.xpose.msra.mxu0 0.0
        %475 = vmatprep.subr.mxu0 0.0
        %476 = vmatpush2.xpose.msra.mxu0 0.0
        %477 = vmatprep.subr.mxu0 0.0
        %478 = vmatpush2.xpose.msra.mxu0 0.0
        %479 = vmatprep.subr.mxu0 0.0
        %480 = vmatpush2.xpose.msra.mxu0 0.0
        %481 = vmatprep.subr.mxu0 0.0
        %482 = vmatpush2.xpose.msra.mxu0 0.0
        %483 = vmatprep.subr.mxu0 0.0
        %484 = vmatpush2.xpose.msra.mxu0 0.0
        %485 = vmatprep.mubr.f32.mxu0 0.0
        %486 = vmatmul.mubr.f32.gmra.mxu0 %v390
        %v487 = vpop.f32.mrf.mxu0
        %v488 = vadd.f32 %v419, %v487
        %v489 = vpop.f32.mrf.mxu0
        %490 = vmatprep.mubr.f32.mxu0 0.0
        %491 = vmatmul.mubr.f32.gmra.mxu0 %v391
        %v492 = vpop.f32.mrf.mxu0
        %v493 = vadd.f32 %v419, %v492
        %v494 = vpop.f32.mrf.mxu0
        %495 = vdwg.mxu0
        %v496 = vld [vmem:[#allocation2] sm:$0xff]
        %v497 = vld [vmem:[#allocation2 + $0x8] sm:$0xff]
        %498 = vmax.xlane.f32.xlu0 %v488
        %v499 = vpop.xlane.xlu0 %498
        %500 = vmax.xlane.f32.xlu0 %v493
        %v501 = vpop.xlane.xlu0 %500
        %v502 = vmax.f32 %v496, %v499
        %v503 = vmax.f32 %v497, %v501
        %v504 = vsub.f32 %v496, %v502
        %v505 = vsub.f32 %v497, %v503
        %v506 = vmul.f32 %v504, 1.442695
        %v507 = vpow.pop %v506
        %v508 = vmul.f32 %v505, 1.442695
        %v509 = vpow.pop %v508
        %v510 = vld [vmem:[#allocation3] sm:$0xff]
        %v511 = vld [vmem:[#allocation3 + $0x8] sm:$0xff]
        %v512 = vmul.f32 %v510, %v507
        %v513 = vmul.f32 %v511, %v509
        %515 = vset.pattern.permute.xlu0 0
        %516 = vperm.xlu0 %515, %v502
        %v517 = vpop.permute.xlu0 %516
        %520 = vset.pattern.permute.xlu0 0
        %521 = vperm.xlu0 %520, %v503
        %v522 = vpop.permute.xlu0 %521
        %v524 = vsub.f32 %v488, %v517
        %v525 = vsub.f32 %v493, %v522
        %v526 = vmul.f32 %v524, 1.442695
        %v527 = vpow.pop %v526
        %v528 = vmul.f32 %v525, 1.442695
        %v529 = vpow.pop %v528
        %530 = vadd.xlane.f32.xlu0 %v527
        %v531 = vpop.xlane.xlu0 %530
        %532 = vadd.xlane.f32.xlu0 %v529
        %v533 = vpop.xlane.xlu0 %532
        %v534 = vadd.f32 %v512, %v531
        %v535 = vadd.f32 %v513, %v533
        %vm536 = vcmask 7168
        %537 = vst.msk [vmem:[#allocation3] sm:$0xff] %vm536, %v534
        %538 = vst.msk [vmem:[#allocation3 + $0x8] sm:$0xff] %vm536, %v535
        %539 = vst.msk [vmem:[#allocation2] sm:$0xff] %vm536, %v502
        %540 = vst.msk [vmem:[#allocation2 + $0x8] sm:$0xff] %vm536, %v503
        %v541 = vlaneseq
        %v542 = vand.u32 %v541, 127
        %s543 = smul.u32 %s28, 128
        %v544 = vstv %s543
        %v545 = vadd.s32 %v542, %v544
        %546 = vset.pattern.permute.xlu0 0
        %547 = vperm.xlu0 %546, %v396
        %v548 = vpop.permute.xlu0 %547
        %549 = vset.pattern.permute.xlu0 0
        %550 = vperm.xlu0 %549, %v397
        %v551 = vpop.permute.xlu0 %550
        %vm552 = vcmp.eq.s32.totalorder %v545, %v548
        %vm553 = vcmp.eq.s32.totalorder %v545, %v551
        %v554 = vld [vmem:[#allocation4] sm:$0xff]
        %v555 = vld [vmem:[#allocation4 + $0x8] sm:$0xff]
        %v556 = vsel %vm552, %v488, 0.0
        %v557 = vsel %vm553, %v493, 0.0
        %558 = vadd.xlane.f32.xlu0 %v556
        %v559 = vpop.xlane.xlu0 %558
        %560 = vadd.xlane.f32.xlu0 %v557
        %v561 = vpop.xlane.xlu0 %560
        %v562 = vadd.f32 %v554, %v559
        %v563 = vadd.f32 %v555, %v561
        %564 = vst.msk [vmem:[#allocation4] sm:$0xff] %vm536, %v562
        %565 = vst.msk [vmem:[#allocation4 + $0x8] sm:$0xff] %vm536, %v563
        %p566 = scmp.eq.s32.totalorder %s28, 3
        // Predicated region
        $region53: #{tpu_custom_call.1} parent=43 // pred_check
          %p567 = pneg %p566
        $region54: #{tpu_custom_call.1} parent=43 // pred_check_branch
          %569 = sbr.rel (%p567) target = $region56
        $region55: #{tpu_custom_call.1} parent=43 // pred_region
          %v570 = vld [vmem:[#allocation2] sm:$0xff]
          %v571 = vld [vmem:[#allocation2 + $0x8] sm:$0xff]
          %v572 = vld [vmem:[#allocation3] sm:$0xff]
          %v573 = vld [vmem:[#allocation3 + $0x8] sm:$0xff]
          %v574 = vlog2.pop %v572
          %v575 = vmul.f32 %v574, 0.6931472
          %v576 = vlog2.pop %v573
          %v577 = vmul.f32 %v576, 0.6931472
          %v578 = vadd.f32 %v570, %v575
          %v579 = vadd.f32 %v571, %v577
          %v580 = vld [vmem:[#allocation4] sm:$0xff]
          %v581 = vld [vmem:[#allocation4 + $0x8] sm:$0xff]
          %v582 = vsub.f32 %v580, %v578
          %v583 = vsub.f32 %v581, %v579
          %v584 = vsel %vm394, 1, 0
          %v585 = vsel %vm395, 1, 0
          %v586 = vcvt.s32.f32 %v584
          %v587 = vcvt.s32.f32 %v585
          %v588 = vmul.f32 %v582, %v586
          %v589 = vmul.f32 %v583, %v587
          %v590 = vsel %vm536, %v588, 0.0
          %591 = vadd.xlane.f32.xlu0 %v590
          %v592 = vpop.xlane.xlu0 %591
          %v593 = vrot.slane %v592, 4
          %v594 = vadd.f32 %v592, %v593
          %v595 = vrot.slane %v594, 2
          %v596 = vadd.f32 %v594, %v595
          %v597 = vrot.slane %v596, 1
          %v598 = vadd.f32 %v596, %v597
          %s599 = vtos %v598
          %v600 = vsel %vm536, %v589, 0.0
          %601 = vadd.xlane.f32.xlu0 %v600
          %v602 = vpop.xlane.xlu0 %601
          %v603 = vrot.slane %v602, 4
          %v604 = vadd.f32 %v602, %v603
          %v605 = vrot.slane %v604, 2
          %v606 = vadd.f32 %v604, %v605
          %v607 = vrot.slane %v606, 1
          %v608 = vadd.f32 %v606, %v607
          %s609 = vtos %v608
          %v610 = vsel %vm536, %v586, 0.0
          %611 = vadd.xlane.f32.xlu0 %v610
          %v612 = vpop.xlane.xlu0 %611
          %v613 = vrot.slane %v612, 4
          %v614 = vadd.f32 %v612, %v613
          %v615 = vrot.slane %v614, 2
          %v616 = vadd.f32 %v614, %v615
          %v617 = vrot.slane %v616, 1
          %v618 = vadd.f32 %v616, %v617
          %s619 = vtos %v618
          %v620 = vsel %vm536, %v587, 0.0
          %621 = vadd.xlane.f32.xlu0 %v620
          %v622 = vpop.xlane.xlu0 %621
          %v623 = vrot.slane %v622, 4
          %v624 = vadd.f32 %v622, %v623
          %v625 = vrot.slane %v624, 2
          %v626 = vadd.f32 %v624, %v625
          %v627 = vrot.slane %v626, 1
          %v628 = vadd.f32 %v626, %v627
          %s629 = vtos %v628
          %s630 = smax.f32 %s619, 1.0
          %v631 = vstv %s630
          %v632 = vrcp.pop %v631
          %s633 = vtos %v632
          %s634 = smul.f32 %s599, %s633
          %s635 = smax.f32 %s629, 1.0
          %v636 = vstv %s635
          %v637 = vrcp.pop %v636
          %s638 = vtos %v637
          %s639 = smul.f32 %s609, %s638
          %s640 = ssub.f32 %s634, %s639
          %s641 = smul.f32 %s640, 0.1
          %s642 = ssub.f32 %s641, 0.5
          %s643 = ssub.f32 0.0, %s642
          %s644 = smax.f32 %s643, 0.0
          %s645 = sand.u32 2147483647, %s642
          %s646 = ssub.f32 0.0, %s645
          %v647 = vstv %s646
          %v648 = vmul.f32 %v647, 1.442695
          %v649 = vpow.pop %v648
          %s650 = vtos %v649
          %v651 = vstv %s650
          %v652 = vadd.f32 %v651, 1.0
          %v653 = vlog2.pop %v652
          %v654 = vmul.f32 %v653, 0.6931472
          %v655 = vmul.f32 -0.5, %v651
          %v656 = vadd.f32 %v655, 1.0
          %v657 = vmul.f32 %v656, %v651
          %v658 = vand.u32 2147483647, %v651
          %vm659 = vcmp.lt.f32.partialorder %v658, 0.0004427343
          %v660 = vsel %vm659, %v657, %v654
          %s661 = vtos %v660
          %s662 = sadd.f32 %s644, %s661
          %s663 = ssub.f32 0.0, %s662
          %s664 = ssub.f32 0.0, %s663
          %s665 = ssub.f32 0.0, %s643
          %s666 = smax.f32 %s665, 0.0
          %s667 = sand.u32 2147483647, %s643
          %s668 = ssub.f32 0.0, %s667
          %v669 = vstv %s668
          %v670 = vmul.f32 %v669, 1.442695
          %v671 = vpow.pop %v670
          %s672 = vtos %v671
          %v673 = vstv %s672
          %v674 = vadd.f32 %v673, 1.0
          %v675 = vlog2.pop %v674
          %v676 = vmul.f32 %v675, 0.6931472
          %v677 = vmul.f32 -0.5, %v673
          %v678 = vadd.f32 %v677, 1.0
          %v679 = vmul.f32 %v678, %v673
          %v680 = vand.u32 2147483647, %v673
          %vm681 = vcmp.lt.f32.partialorder %v680, 0.0004427343
          %v682 = vsel %vm681, %v679, %v676
          %s683 = vtos %v682
          %s684 = sadd.f32 %s666, %s683
          %s685 = ssub.f32 0.0, %s684
          %s686 = smul.f32 %s685, 0.0
          %s687 = ssub.f32 %s664, %s686
          %vm688 = vcmp.eq.s32.totalorder %v542, 0
          %v689 = vsel %vm688, 1, 0
          %v690 = vcvt.s32.f32 %v689
          %v691 = vstv %s687
          %v692 = vmul.f32 %v691, %v690
          %s693 = ssub.f32 0.0, %s599
          %vm694 = vcmp.eq.s32.totalorder %v542, 1
          %v695 = vsel %vm694, 1, 0
          %v696 = vcvt.s32.f32 %v695
          %v697 = vstv %s693
          %v698 = vmul.f32 %v697, %v696
          %v699 = vadd.f32 %v692, %v698
          %vm700 = vcmp.eq.s32.totalorder %v542, 2
          %v701 = vsel %vm700, 1, 0
          %v702 = vcvt.s32.f32 %v701
          %v703 = vstv %s619
          %v704 = vmul.f32 %v703, %v702
          %v705 = vadd.f32 %v699, %v704
          %s706 = smul.f32 %s634, 0.1
          %vm707 = vcmp.eq.s32.totalorder %v542, 3
          %v708 = vsel %vm707, 1, 0
          %v709 = vcvt.s32.f32 %v708
          %v710 = vstv %s706
          %v711 = vmul.f32 %v710, %v709
          %v712 = vadd.f32 %v705, %v711
          %s713 = smul.f32 %s639, 0.1
          %vm714 = vcmp.eq.s32.totalorder %v542, 4
          %v715 = vsel %vm714, 1, 0
          %v716 = vcvt.s32.f32 %v715
          %v717 = vstv %s713
          %v718 = vmul.f32 %v717, %v716
          %v719 = vadd.f32 %v712, %v718
          %720 = vst [vmem:[%s354] sm:$0xff] %v719
        $region56: #{tpu_custom_call.1} parent=43 // pred_fallthru
          _
        %s721 = sand.u32 %s203, 1
        %s722 = scalar_lea.sflag [#allocation7], %s721
        %s723 = sand.u32 %s203, 1
        %s724 = smul.addr %s723, 8
        %s725 = scalar_lea.vmem [#allocation8], %s724
        // Predicated region
        $region57: #{tpu_custom_call.1} parent=43 // pred_check
          %p726 = pneg %p213
        $region58: #{tpu_custom_call.1} parent=43 // pred_check_branch
          %728 = sbr.rel (%p726) target = $region60
        $region59: #{tpu_custom_call.1} parent=43 // pred_region
          %s730 = ssub.s32 128, 128
          %731 = vsyncadd %s722, %s730
          %s732 = smul.addr %s27, 128
          %s733 = scalar_lea.hbm %s6, %s732
          %s735 = sshll.u32 %s725, 4
          %s736 = int_to_ptr.vmem [resolvable:$true] %s735
          %738 = dma.vmem_to_hbm [thread:$0]  %s736, 128, %s733, %s722
        $region60: #{tpu_custom_call.1} parent=43 // pred_fallthru
          _
      $region44: #{tpu_custom_call.1} parent=5 // pred_fallthru
        _
      %p739 = scmp.le.s32.totalorder 2, %s18
      // Predicated region
      $region61: #{tpu_custom_call.1} parent=5 // pred_check
        %p740 = pneg %p739
      $region62: #{tpu_custom_call.1} parent=5 // pred_check_branch
        %742 = sbr.rel (%p740) target = $region64
      $region63: #{tpu_custom_call.1} parent=5 // pred_region
        %s743 = ssub.s32 %s18, 2
        // Predicated region
        $region65: #{tpu_custom_call.1} parent=63 // pred_check
          %p744 = pneg %p219
        $region66: #{tpu_custom_call.1} parent=63 // pred_check_branch
          %746 = sbr.rel (%p744) target = $region68
        $region67: #{tpu_custom_call.1} parent=63 // pred_region
          %s747 = sand.u32 %s204, 1
          %s748 = scalar_lea.sflag [#allocation7], %s747
          %s749 = sand.u32 %s204, 1
          %s750 = smul.addr %s749, 8
          %s751 = scalar_lea.vmem [#allocation8], %s750
          %752 = dma.done %s748, 128
        $region68: #{tpu_custom_call.1} parent=63 // pred_fallthru
          _
      $region64: #{tpu_custom_call.1} parent=5 // pred_fallthru
        _
    $region6: #{tpu_custom_call.1} parent=1 // loop_footer
      %s22 = sadd.s32 1, %s18
    $region7: #{tpu_custom_call.1} parent=1 // loop_footer_branch
      %17 = sbr.rel target = $region3
    $region8: #{tpu_custom_call.1} parent=1 // loop_exit
      _
    %753 = vsyncpa [#allocation6], 1
    %s754 = scalar_lea.sflag [#allocation6], 1
    %755 = vsyncpa %s754, 1
    %756 = vsyncpa [#allocation7], 1
    %s757 = scalar_lea.sflag [#allocation7], 1
    %758 = vsyncpa %s757, 1

</llo_original>
